<compile_context>
chip_gen: v7x
topology: tpu7x:2x2x1
jax: 0.10.0
libtpu: 0.0.40
codegen_flags: <defaults>
</compile_context>

<pallas_src>
import jax
import jax.numpy as jnp
from jax.experimental import pallas as pl
from jax.experimental.pallas import tpu as pltpu

NUM_ACTIONS = 12  # len(A) = 1 (submit) + 11 ratios


def _round_up(n, m):
    return ((n + m - 1) // m) * m


def _cdiv(a, b):
    return -(-a // b)


def _studentq_kernel(x_ref, w1_ref, b1_ref, w2_ref, b2_ref, o_ref):
    x = x_ref[...]                                   # (3, TB)  batch on lanes

    # fc1 on the MXU: (H, 3) @ (3, TB) -> (H, TB).  K=3 is padded inside the
    # MXU, which has plenty of slack here; keeps the VALU free.
    h = jnp.dot(w1_ref[...], x, preferred_element_type=jnp.float32)
    h = jnp.maximum(h + b1_ref[...], 0.0)            # bias + ReLU on the VPU

    # fc2 on the MXU: (12, H) @ (H, TB) -> lane-dense N = TB.
    out = jnp.dot(w2_ref[...], h, preferred_element_type=jnp.float32)
    o_ref[...] = (out + b2_ref[...]).astype(o_ref.dtype)


def student_q_forward(x, w1, b1, w2, b2, *, block_b=16384, out_dtype=jnp.float32):
    """x: (B, 3); w1: (H, 3); b1: (H,); w2: (12, H); b2: (12,) -> (B, 12).

    block_b: batch tile size in lanes (rounded to a multiple of 128).
    out_dtype: Q-value dtype; keep float32 for exact parity with PyTorch,
    use bfloat16 if downstream (argmax over 12 actions) tolerates it, which
    roughly halves HBM writeback traffic.
    """
    B = x.shape[0]
    H = w1.shape[0]
    assert x.shape == (B, 3)
    assert w1.shape == (H, 3) and b1.shape == (H,)
    assert w2.shape == (NUM_ACTIONS, H) and b2.shape == (NUM_ACTIONS,)

    # Pad the batch only to the next multiple of 128 lanes (layout minimum).
    Bp = _round_up(B, 128)

    # Batch tile: multiple of 128, no larger than the padded batch.
    tb = max(128, min(_round_up(block_b, 128), Bp))
    # If everything fits in one tile but there are >= 256 lanes, split into
    # two tiles so both v7x TensorCores get a grid step to work on.
    if tb >= Bp and Bp >= 256:
        tb = _round_up(_cdiv(Bp, 2), 128)
    grid_b = _cdiv(Bp, tb)

    # Batch-on-lanes layout; zero-pad the (cheap, <=127 column) ragged tail.
    xt = x.T                                           # (3, B)
    if Bp != B:
        xt = jnp.pad(xt, ((0, 0), (0, Bp - B)))        # (3, Bp)

    b1_2d = b1.reshape(H, 1)
    b2_2d = b2.reshape(NUM_ACTIONS, 1)

    # Only needed if a caller pushes block_b far beyond the default.
    est_vmem = 4 * tb * (2 * (3 + NUM_ACTIONS) + 2 * H) + 4 * H * (3 + NUM_ACTIONS + 2)
    compiler_kwargs = dict(dimension_semantics=("parallel",))
    if est_vmem > 12 * 1024 * 1024:
        compiler_kwargs["vmem_limit_bytes"] = min(2 * est_vmem, 100 * 1024 * 1024)

    cost = pl.CostEstimate(
        flops=2 * B * H * (3 + NUM_ACTIONS),
        transcendentals=0,
        bytes_accessed=4 * (Bp * (3 + NUM_ACTIONS) + H * (3 + NUM_ACTIONS + 2)),
    )

    out_t = pl.pallas_call(
        _studentq_kernel,
        out_shape=jax.ShapeDtypeStruct((NUM_ACTIONS, Bp), out_dtype),
        grid=(grid_b,),
        in_specs=[
            pl.BlockSpec((3, tb), lambda i: (0, i)),            # x tile
            pl.BlockSpec((H, 3), lambda i: (0, 0)),             # w1 (VMEM-resident)
            pl.BlockSpec((H, 1), lambda i: (0, 0)),             # b1 (VMEM-resident)
            pl.BlockSpec((NUM_ACTIONS, H), lambda i: (0, 0)),   # w2 (VMEM-resident)
            pl.BlockSpec((NUM_ACTIONS, 1), lambda i: (0, 0)),   # b2 (VMEM-resident)
        ],
        out_specs=pl.BlockSpec((NUM_ACTIONS, tb), lambda i: (0, i)),
        compiler_params=pltpu.CompilerParams(**compiler_kwargs),
        cost_estimate=cost,
    )(xt, w1, b1_2d, w2, b2_2d)

    # Slice padded lanes first, then transpose back to (B, 12).
    return out_t[:, :B].T


def init_params(key, hidden_dim):
    """Deterministic synthetic parameters with PyTorch Linear shapes."""
    k1, k2, k3, k4 = jax.random.split(key, 4)
    # fc1: nn.Linear(3, hidden_dim) -> weight (hidden_dim, 3)
    w1 = jax.random.normal(k1, (hidden_dim, 3), dtype=jnp.float32) * 0.5
    b1 = jax.random.normal(k2, (hidden_dim,), dtype=jnp.float32) * 0.1
    # fc2: nn.Linear(hidden_dim, 12) -> weight (12, hidden_dim)
    w2 = jax.random.normal(k3, (NUM_ACTIONS, hidden_dim), dtype=jnp.float32) * 0.5
    b2 = jax.random.normal(k4, (NUM_ACTIONS,), dtype=jnp.float32) * 0.1
    return w1, b1, w2, b2


def _reference(x, w1, b1, w2, b2):
    return jnp.maximum(x @ w1.T + b1, 0.0) @ w2.T + b2


if __name__ == "__main__":
    key = jax.random.PRNGKey(0)
    kx, kp = jax.random.split(key)

    batch = 8
    hidden_dim = 32

    x = jax.random.normal(kx, (batch, 3), dtype=jnp.float32)
    w1, b1, w2, b2 = init_params(kp, hidden_dim)

    out = jax.block_until_ready(student_q_forward(x, w1, b1, w2, b2))
    ref = _reference(x, w1, b1, w2, b2)
    assert out.shape == (batch, NUM_ACTIONS)
    assert jnp.allclose(out, ref, atol=1e-5, rtol=1e-5)

    # Ragged batch, default tile -> 2 grid steps (v7x dual-TC path) with a
    # partial (masked-store) last block.
    big_B = 300
    xb = jax.random.normal(jax.random.PRNGKey(7), (big_B, 3), dtype=jnp.float32)
    outb = jax.block_until_ready(student_q_forward(xb, w1, b1, w2, b2))
    refb = _reference(xb, w1, b1, w2, b2)
    assert outb.shape == (big_B, NUM_ACTIONS)
    assert jnp.allclose(outb, refb, atol=1e-5, rtol=1e-5)

    # Same ragged batch with a small explicit tile -> 3 grid steps.
    outc = jax.block_until_ready(
        student_q_forward(xb, w1, b1, w2, b2, block_b=128)
    )
    assert jnp.allclose(outc, refb, atol=1e-5, rtol=1e-5)

    print("KERNEL_OK")
</pallas_src>

<mosaic_0001>
module attributes {stable_mosaic.version = 11 : i64} {
  func.func @_studentq_kernel(%arg0: i32, %arg1: memref<3x128xf32, #tpu.memory_space<vmem>>, %arg2: memref<32x3xf32, #tpu.memory_space<vmem>>, %arg3: memref<32x1xf32, #tpu.memory_space<vmem>>, %arg4: memref<12x32xf32, #tpu.memory_space<vmem>>, %arg5: memref<12x1xf32, #tpu.memory_space<vmem>>, %arg6: memref<12x128xf32, #tpu.memory_space<vmem>>) attributes {dimension_semantics = [#tpu.dimension_semantics<parallel>], iteration_bounds = array<i64: 1>, scalar_prefetch = 0 : i64, scratch_operands = 0 : i64, tpu.core_type = #tpu.core_type<tc>, window_params = [{transform_indices = @transform_0, window_bounds = array<i64: 3, 128>}, {pipeline_mode = #tpu.pipeline_mode<synchronous>, transform_indices = @transform_1, window_bounds = array<i64: 32, 3>}, {pipeline_mode = #tpu.pipeline_mode<synchronous>, transform_indices = @transform_2, window_bounds = array<i64: 32, 1>}, {pipeline_mode = #tpu.pipeline_mode<synchronous>, transform_indices = @transform_3, window_bounds = array<i64: 12, 32>}, {pipeline_mode = #tpu.pipeline_mode<synchronous>, transform_indices = @transform_4, window_bounds = array<i64: 12, 1>}, {transform_indices = @transform_5, window_bounds = array<i64: 12, 128>}]} {
    %c0 = arith.constant 0 : index
    %c0_0 = arith.constant 0 : index
    %0 = vector.load %arg1[%c0, %c0_0] : memref<3x128xf32, #tpu.memory_space<vmem>>, vector<3x128xf32>
    %c0_1 = arith.constant 0 : index
    %c0_2 = arith.constant 0 : index
    %1 = vector.load %arg2[%c0_1, %c0_2] : memref<32x3xf32, #tpu.memory_space<vmem>>, vector<32x3xf32>
    %cst = arith.constant dense<0.000000e+00> : vector<32x128xf32>
    %2 = tpu.matmul %1, %0, %cst {dimension_numbers = #tpu.dot_dimension_numbers<[1], [0], [0], [1], [0, 0, 1, 1], [], []>} : vector<32x3xf32>, vector<3x128xf32>, vector<32x128xf32> -> vector<32x128xf32>
    %c0_3 = arith.constant 0 : index
    %c0_4 = arith.constant 0 : index
    %3 = vector.load %arg3[%c0_3, %c0_4] : memref<32x1xf32, #tpu.memory_space<vmem>>, vector<32x1xf32>
    %4 = vector.broadcast %3 : vector<32x1xf32> to vector<32x128xf32>
    %5 = arith.addf %2, %4 : vector<32x128xf32>
    %cst_5 = arith.constant 0.000000e+00 : f32
    %6 = vector.broadcast %cst_5 : f32 to vector<32x128xf32>
    %7 = arith.maximumf %5, %6 : vector<32x128xf32>
    %c0_6 = arith.constant 0 : index
    %c0_7 = arith.constant 0 : index
    %8 = vector.load %arg4[%c0_6, %c0_7] : memref<12x32xf32, #tpu.memory_space<vmem>>, vector<12x32xf32>
    %cst_8 = arith.constant dense<0.000000e+00> : vector<12x128xf32>
    %9 = tpu.matmul %8, %7, %cst_8 {dimension_numbers = #tpu.dot_dimension_numbers<[1], [0], [0], [1], [0, 0, 1, 1], [], []>} : vector<12x32xf32>, vector<32x128xf32>, vector<12x128xf32> -> vector<12x128xf32>
    %c0_9 = arith.constant 0 : index
    %c0_10 = arith.constant 0 : index
    %10 = vector.load %arg5[%c0_9, %c0_10] : memref<12x1xf32, #tpu.memory_space<vmem>>, vector<12x1xf32>
    %11 = vector.broadcast %10 : vector<12x1xf32> to vector<12x128xf32>
    %12 = arith.addf %9, %11 : vector<12x128xf32>
    %c0_11 = arith.constant 0 : index
    %c0_12 = arith.constant 0 : index
    %13 = vector.load %arg6[%c0_11, %c0_12] : memref<12x128xf32, #tpu.memory_space<vmem>>, vector<12x128xf32>
    tpu.vector_store %arg6[%c0_11, %c0_12], %12 {strides = array<i32>} : memref<12x128xf32, #tpu.memory_space<vmem>>, vector<12x128xf32>,
    return
  }
  func.func @transform_0(%arg0: i32) -> (i32, i32) {
    %c0_i32 = arith.constant 0 : i32
    %c0_i32_0 = arith.constant 0 : i32
    return %c0_i32, %arg0 : i32, i32
  }
  func.func @transform_1(%arg0: i32) -> (i32, i32) {
    %c0_i32 = arith.constant 0 : i32
    %c0_i32_0 = arith.constant 0 : i32
    %c0_i32_1 = arith.constant 0 : i32
    return %c0_i32, %c0_i32_0 : i32, i32
  }
  func.func @transform_2(%arg0: i32) -> (i32, i32) {
    %c0_i32 = arith.constant 0 : i32
    %c0_i32_0 = arith.constant 0 : i32
    %c0_i32_1 = arith.constant 0 : i32
    return %c0_i32, %c0_i32_0 : i32, i32
  }
  func.func @transform_3(%arg0: i32) -> (i32, i32) {
    %c0_i32 = arith.constant 0 : i32
    %c0_i32_0 = arith.constant 0 : i32
    %c0_i32_1 = arith.constant 0 : i32
    return %c0_i32, %c0_i32_0 : i32, i32
  }
  func.func @transform_4(%arg0: i32) -> (i32, i32) {
    %c0_i32 = arith.constant 0 : i32
    %c0_i32_0 = arith.constant 0 : i32
    %c0_i32_1 = arith.constant 0 : i32
    return %c0_i32, %c0_i32_0 : i32, i32
  }
  func.func @transform_5(%arg0: i32) -> (i32, i32) {
    %c0_i32 = arith.constant 0 : i32
    %c0_i32_0 = arith.constant 0 : i32
    return %c0_i32, %arg0 : i32, i32
  }
}

</mosaic_0001>

<llo_original>
// kernel: tpu_custom_call.1
$region0: #{tpu_custom_call.1}
  #allocation0 [shape = 'u32[]', space=smem, size = 0x4, offset = 0x4, fixed_abs, tag = 'smem constant byte address 0x4 - core index']
  #allocation1 [shape = 'u32[144,128]{1,0:T(1,128)}', space=vmem, size = 0x12000, scoped, tag = 'internal scratch']
  %s0 = inlined_call_operand.vmem [shape: f32[3,128], index: 0, kind: input, shape index: {}]
  %s1 = inlined_call_operand.vmem [shape: f32[32,3], index: 1, kind: input, shape index: {}]
  %s2 = inlined_call_operand.vmem [shape: f32[32,1], index: 2, kind: input, shape index: {}]
  %s3 = inlined_call_operand.vmem [shape: f32[12,32], index: 3, kind: input, shape index: {}]
  %s4 = inlined_call_operand.vmem [shape: f32[12,1], index: 4, kind: input, shape index: {}]
  %s5 = inlined_call_operand.hbm [shape: f32[12,128], index: 5, kind: output, shape index: {}]
  %s6 = sld [smem:[#allocation0]]
  $region30: #{tpu_custom_call.1} parent=0
    _
  %s8 = ssub.s32 1, %s6
  %s9 = scalar_select 0, %s8, %s6
  $region1: #{tpu_custom_call.1} parent=0
    #allocation2 [shape = 'u8[8192]{0}', space=vmem, size = 0x2000, scoped, tag = 'output window, operand 0, single buffered']
    #allocation3 [shape = 's32[1]{0}', space=sflag, size = 0x4, scoped, tag = 'scoped memory for tpu_custom_call.1']
    %10 = vsyncpa [#allocation3], 0
    // Predicated region
    $region2: #{tpu_custom_call.1} parent=1 // pred_check
      _
    $region3: #{tpu_custom_call.1} parent=1 // pred_check_branch
      %12 = sbr.rel (0) target = $region5
    $region4: #{tpu_custom_call.1} parent=1 // pred_region
      _
    $region5: #{tpu_custom_call.1} parent=1 // pred_fallthru
      _
    // Predicated region
    $region6: #{tpu_custom_call.1} parent=1 // pred_check
      _
    $region7: #{tpu_custom_call.1} parent=1 // pred_check_branch
      %14 = sbr.rel (0) target = $region9
    $region8: #{tpu_custom_call.1} parent=1 // pred_region
      _
    $region9: #{tpu_custom_call.1} parent=1 // pred_fallthru
      _
    // Predicated region
    $region10: #{tpu_custom_call.1} parent=1 // pred_check
      _
    $region11: #{tpu_custom_call.1} parent=1 // pred_check_branch
      %16 = sbr.rel (0) target = $region13
    $region12: #{tpu_custom_call.1} parent=1 // pred_region
      _
    $region13: #{tpu_custom_call.1} parent=1 // pred_fallthru
      _
    // Predicated region
    $region14: #{tpu_custom_call.1} parent=1 // pred_check
      _
    $region15: #{tpu_custom_call.1} parent=1 // pred_check_branch
      %18 = sbr.rel (0) target = $region17
    $region16: #{tpu_custom_call.1} parent=1 // pred_region
      _
    $region17: #{tpu_custom_call.1} parent=1 // pred_fallthru
      _
    // Predicated region
    $region18: #{tpu_custom_call.1} parent=1 // pred_check
      _
    $region19: #{tpu_custom_call.1} parent=1 // pred_check_branch
      %20 = sbr.rel (0) target = $region21
    $region20: #{tpu_custom_call.1} parent=1 // pred_region
      _
    $region21: #{tpu_custom_call.1} parent=1 // pred_fallthru
      _
    %v21 = vld [vmem:[%s0] sm:$0x7]
    %v22 = vld [vmem:[%s1] sm:$0xff]
    %v23 = vld [vmem:[%s1 + $0x8] sm:$0xff]
    %v24 = vld [vmem:[%s1 + $0x10] sm:$0xff]
    %v25 = vld [vmem:[%s1 + $0x18] sm:$0xff]
    %v26 = vld [vmem:[%s2] sm:$0xff]
    %v27 = vld [vmem:[%s2 + $0x8] sm:$0xff]
    %v28 = vld [vmem:[%s2 + $0x10] sm:$0xff]
    %v29 = vld [vmem:[%s2 + $0x18] sm:$0xff]
    %31 = vset.pattern.permute.xlu0 0
    %32 = vperm.xlu0 %31, %v26
    %v33 = vpop.permute.xlu0 %32
    %36 = vset.pattern.permute.xlu0 0
    %37 = vperm.xlu0 %36, %v27
    %v38 = vpop.permute.xlu0 %37
    %41 = vset.pattern.permute.xlu0 0
    %42 = vperm.xlu0 %41, %v28
    %v43 = vpop.permute.xlu0 %42
    %46 = vset.pattern.permute.xlu0 0
    %47 = vperm.xlu0 %46, %v29
    %v48 = vpop.permute.xlu0 %47
    %vm50 = vcmask 23552
    %v52 = vsel %vm50, %v22, 0
    %v55 = vsel %vm50, %v23, 0
    %v58 = vsel %vm50, %v24, 0
    %v61 = vsel %vm50, %v25, 0
    %vm63 = vcmask 1042432
    %v65 = vsel %vm63, %v21, 0
    %67 = vmatprep.subr.mxu0 0.0
    %68 = vmatpush1.msra.mxu0 %v65
    %69 = vmatprep.subr.mxu0 0.0
    %70 = vmatpush1.msra.mxu0 0.0
    %71 = vmatprep.subr.mxu0 0.0
    %72 = vmatpush1.msra.mxu0 0.0
    %73 = vmatprep.subr.mxu0 0.0
    %74 = vmatpush1.msra.mxu0 0.0
    %75 = vmatprep.subr.mxu0 0.0
    %76 = vmatpush1.msra.mxu0 0.0
    %77 = vmatprep.subr.mxu0 0.0
    %78 = vmatpush1.msra.mxu0 0.0
    %79 = vmatprep.subr.mxu0 0.0
    %80 = vmatpush1.msra.mxu0 0.0
    %81 = vmatprep.subr.mxu0 0.0
    %82 = vmatpush1.msra.mxu0 0.0
    %83 = vmatprep.subr.mxu0 0.0
    %84 = vmatpush1.msra.mxu0 0.0
    %85 = vmatprep.subr.mxu0 0.0
    %86 = vmatpush1.msra.mxu0 0.0
    %87 = vmatprep.subr.mxu0 0.0
    %88 = vmatpush1.msra.mxu0 0.0
    %89 = vmatprep.subr.mxu0 0.0
    %90 = vmatpush1.msra.mxu0 0.0
    %91 = vmatprep.subr.mxu0 0.0
    %92 = vmatpush1.msra.mxu0 0.0
    %93 = vmatprep.subr.mxu0 0.0
    %94 = vmatpush1.msra.mxu0 0.0
    %95 = vmatprep.subr.mxu0 0.0
    %96 = vmatpush1.msra.mxu0 0.0
    %97 = vmatprep.subr.mxu0 0.0
    %98 = vmatpush1.msra.mxu0 0.0
    %99 = vmatprep.subr.mxu0 0.0
    %100 = vmatpush1.msra.mxu0 0.0
    %101 = vmatprep.subr.mxu0 0.0
    %102 = vmatpush1.msra.mxu0 0.0
    %103 = vmatprep.subr.mxu0 0.0
    %104 = vmatpush1.msra.mxu0 0.0
    %105 = vmatprep.subr.mxu0 0.0
    %106 = vmatpush1.msra.mxu0 0.0
    %107 = vmatprep.subr.mxu0 0.0
    %108 = vmatpush1.msra.mxu0 0.0
    %109 = vmatprep.subr.mxu0 0.0
    %110 = vmatpush1.msra.mxu0 0.0
    %111 = vmatprep.subr.mxu0 0.0
    %112 = vmatpush1.msra.mxu0 0.0
    %113 = vmatprep.subr.mxu0 0.0
    %114 = vmatpush1.msra.mxu0 0.0
    %115 = vmatprep.subr.mxu0 0.0
    %116 = vmatpush1.msra.mxu0 0.0
    %117 = vmatprep.subr.mxu0 0.0
    %118 = vmatpush1.msra.mxu0 0.0
    %119 = vmatprep.subr.mxu0 0.0
    %120 = vmatpush1.msra.mxu0 0.0
    %121 = vmatprep.subr.mxu0 0.0
    %122 = vmatpush1.msra.mxu0 0.0
    %123 = vmatprep.subr.mxu0 0.0
    %124 = vmatpush1.msra.mxu0 0.0
    %125 = vmatprep.subr.mxu0 0.0
    %126 = vmatpush1.msra.mxu0 0.0
    %127 = vmatprep.subr.mxu0 0.0
    %128 = vmatpush1.msra.mxu0 0.0
    %129 = vmatprep.subr.mxu0 0.0
    %130 = vmatpush1.msra.mxu0 0.0
    %131 = vmatprep.mubr.f32.mxu0 0.0
    %132 = vmatmul.mubr.f32.gmra.mrb[0].mxu0 %v52
    %v133 = vpop.f32.mrb[0].mxu0
    %v134 = vadd.f32 %v33, %v133
    %v135 = vpop.f32.mrb[0].mxu0
    %136 = vmatprep.mubr.f32.mxu0 0.0
    %137 = vmatmul.mubr.f32.gmra.mrb[0].mxu0 %v55
    %v138 = vpop.f32.mrb[0].mxu0
    %v139 = vadd.f32 %v38, %v138
    %v140 = vpop.f32.mrb[0].mxu0
    %141 = vmatprep.mubr.f32.mxu0 0.0
    %142 = vmatmul.mubr.f32.gmra.mrb[0].mxu0 %v58
    %v143 = vpop.f32.mrb[0].mxu0
    %v144 = vadd.f32 %v43, %v143
    %v145 = vpop.f32.mrb[0].mxu0
    %146 = vmatprep.mubr.f32.mxu0 0.0
    %147 = vmatmul.mubr.f32.gmra.mrb[0].mxu0 %v61
    %v148 = vpop.f32.mrb[0].mxu0
    %v149 = vadd.f32 %v48, %v148
    %v150 = vpop.f32.mrb[0].mxu0
    %151 = vdwg.mxu0
    %v152 = vmax.f32 %v134, 0.0
    %v153 = vmax.f32 %v139, 0.0
    %v154 = vmax.f32 %v144, 0.0
    %v155 = vmax.f32 %v149, 0.0
    %v156 = vld [vmem:[%s3] sm:$0xff]
    %v157 = vld [vmem:[%s3 + $0x8] sm:$0xf]
    %v158 = vld [vmem:[%s4] sm:$0xff]
    %v159 = vld [vmem:[%s4 + $0x8] sm:$0xf]
    %161 = vset.pattern.permute.xlu0 0
    %162 = vperm.xlu0 %161, %v158
    %v163 = vpop.permute.xlu0 %162
    %166 = vset.pattern.permute.xlu0 0
    %167 = vperm.xlu0 %166, %v159
    %v168 = vpop.permute.xlu0 %167
    %vm170 = vcmask 261120
    %v172 = vsel %vm170, %v156, 0
    %v175 = vsel %vm170, %v157, 0
    %177 = vmatprep.subr.mxu0 0.0
    %178 = vmatpush1.msra.mxu0 %v152
    %179 = vmatprep.subr.mxu0 0.0
    %180 = vmatpush1.msra.mxu0 %v153
    %181 = vmatprep.subr.mxu0 0.0
    %182 = vmatpush1.msra.mxu0 %v154
    %183 = vmatprep.subr.mxu0 0.0
    %184 = vmatpush1.msra.mxu0 %v155
    %185 = vmatprep.subr.mxu0 0.0
    %186 = vmatpush1.msra.mxu0 0.0
    %187 = vmatprep.subr.mxu0 0.0
    %188 = vmatpush1.msra.mxu0 0.0
    %189 = vmatprep.subr.mxu0 0.0
    %190 = vmatpush1.msra.mxu0 0.0
    %191 = vmatprep.subr.mxu0 0.0
    %192 = vmatpush1.msra.mxu0 0.0
    %193 = vmatprep.subr.mxu0 0.0
    %194 = vmatpush1.msra.mxu0 0.0
    %195 = vmatprep.subr.mxu0 0.0
    %196 = vmatpush1.msra.mxu0 0.0
    %197 = vmatprep.subr.mxu0 0.0
    %198 = vmatpush1.msra.mxu0 0.0
    %199 = vmatprep.subr.mxu0 0.0
    %200 = vmatpush1.msra.mxu0 0.0
    %201 = vmatprep.subr.mxu0 0.0
    %202 = vmatpush1.msra.mxu0 0.0
    %203 = vmatprep.subr.mxu0 0.0
    %204 = vmatpush1.msra.mxu0 0.0
    %205 = vmatprep.subr.mxu0 0.0
    %206 = vmatpush1.msra.mxu0 0.0
    %207 = vmatprep.subr.mxu0 0.0
    %208 = vmatpush1.msra.mxu0 0.0
    %209 = vmatprep.subr.mxu0 0.0
    %210 = vmatpush1.msra.mxu0 0.0
    %211 = vmatprep.subr.mxu0 0.0
    %212 = vmatpush1.msra.mxu0 0.0
    %213 = vmatprep.subr.mxu0 0.0
    %214 = vmatpush1.msra.mxu0 0.0
    %215 = vmatprep.subr.mxu0 0.0
    %216 = vmatpush1.msra.mxu0 0.0
    %217 = vmatprep.subr.mxu0 0.0
    %218 = vmatpush1.msra.mxu0 0.0
    %219 = vmatprep.subr.mxu0 0.0
    %220 = vmatpush1.msra.mxu0 0.0
    %221 = vmatprep.subr.mxu0 0.0
    %222 = vmatpush1.msra.mxu0 0.0
    %223 = vmatprep.subr.mxu0 0.0
    %224 = vmatpush1.msra.mxu0 0.0
    %225 = vmatprep.subr.mxu0 0.0
    %226 = vmatpush1.msra.mxu0 0.0
    %227 = vmatprep.subr.mxu0 0.0
    %228 = vmatpush1.msra.mxu0 0.0
    %229 = vmatprep.subr.mxu0 0.0
    %230 = vmatpush1.msra.mxu0 0.0
    %231 = vmatprep.subr.mxu0 0.0
    %232 = vmatpush1.msra.mxu0 0.0
    %233 = vmatprep.subr.mxu0 0.0
    %234 = vmatpush1.msra.mxu0 0.0
    %235 = vmatprep.subr.mxu0 0.0
    %236 = vmatpush1.msra.mxu0 0.0
    %237 = vmatprep.subr.mxu0 0.0
    %238 = vmatpush1.msra.mxu0 0.0
    %239 = vmatprep.subr.mxu0 0.0
    %240 = vmatpush1.msra.mxu0 0.0
    %241 = vmatprep.mubr.f32.mxu0 0.0
    %242 = vmatmul.mubr.f32.gmra.mrb[0].mxu0 %v172
    %v243 = vpop.f32.mrb[0].mxu0
    %v244 = vadd.f32 %v163, %v243
    %v245 = vpop.f32.mrb[0].mxu0
    %246 = vmatprep.mubr.f32.mxu0 0.0
    %247 = vmatmul.mubr.f32.gmra.mrb[0].mxu0 %v175
    %v248 = vpop.f32.mrb[0].mxu0
    %v249 = vadd.f32 %v168, %v248
    %v250 = vpop.f32.mrb[0].mxu0
    %251 = vdwg.mxu0
    %252 = vst [vmem:[#allocation2] sm:$0xff] %v244
    %253 = vst [vmem:[#allocation2 + $0x8] sm:$0xf] %v249
    // Predicated region
    $region22: #{tpu_custom_call.1} parent=1 // pred_check
      _
    $region23: #{tpu_custom_call.1} parent=1 // pred_check_branch
      %255 = sbr.rel (0) target = $region25
    $region24: #{tpu_custom_call.1} parent=1 // pred_region
      %s257 = ssub.s32 256, 256
      %258 = vsyncadd [#allocation3], %s257
      %s259 = sshll.u32 [#allocation2], 4
      %s260 = int_to_ptr.vmem [resolvable:$true] %s259
      %265 = dma.vmem_to_hbm [thread:$0]  %s260, 256, %s5, [#allocation3], 128, 128, 8
    $region25: #{tpu_custom_call.1} parent=1 // pred_fallthru
      _
    // Predicated region
    $region26: #{tpu_custom_call.1} parent=1 // pred_check
      _
    $region27: #{tpu_custom_call.1} parent=1 // pred_check_branch
      %267 = sbr.rel (0) target = $region29
    $region28: #{tpu_custom_call.1} parent=1 // pred_region
      %268 = dma.done [#allocation3], 256
    $region29: #{tpu_custom_call.1} parent=1 // pred_fallthru
      _
    %269 = vsyncpa [#allocation3], 1

</llo_original>
